<compile_context>
chip_gen: v7x
topology: tpu7x:2x2x1
jax: 0.10.0
libtpu: 0.0.40
codegen_flags: <defaults>
</compile_context>

<pallas_src>
import jax
import jax.numpy as jnp
from jax.experimental import pallas as pl
from jax.experimental.pallas import tpu as pltpu

IN_FEATURES = 2
OUT_FEATURES = 2
SUBLANE = 8
MAX_TILE_N = 1024   # 1024 x 2 f32 = 8 KiB per block buffer -> trivial VMEM on v5e/v6e/v7x


def _round_up(v, m):
    return (v + m - 1) // m * m


def _choose_tile(n):
    """Rows per grid step: multiple of 8, <= MAX_TILE_N, grid length >= 2 when possible."""
    n8 = _round_up(max(n, 1), SUBLANE)
    half = _round_up(-(-n8 // 2), SUBLANE)     # ceil(n/2) rounded up to a sublane
    return max(SUBLANE, min(MAX_TILE_N, half))


def _linear_kernel(w_ref, b_ref, x_ref, o_ref):
    # w_ref: (2, 2) f32 in SMEM (PyTorch layout: [out_features, in_features])
    # b_ref: (2,)   f32 in SMEM
    # x_ref: (tile_n, 2) in VMEM
    # o_ref: (tile_n, 2) in VMEM
    x = x_ref[...].astype(jnp.float32)
    x0 = x[:, 0:1]                                                # (tile_n, 1)
    x1 = x[:, 1:2]
    lane = jax.lax.broadcasted_iota(jnp.int32, o_ref.shape, 1)    # output column j
    w_j0 = jnp.where(lane == 0, w_ref[0, 0], w_ref[1, 0])         # weight[j, 0]
    w_j1 = jnp.where(lane == 0, w_ref[0, 1], w_ref[1, 1])         # weight[j, 1]
    b_j = jnp.where(lane == 0, b_ref[0], b_ref[1])                # bias[j]
    o_ref[...] = (x0 * w_j0 + x1 * w_j1 + b_j).astype(o_ref.dtype)


@jax.jit
def linear_block_forward(x, weight, bias):
    """y = x @ weight.T + bias — matmul-free VPU kernel, weights resident in SMEM."""
    n, f_in = x.shape
    assert f_in == IN_FEATURES and weight.shape == (OUT_FEATURES, IN_FEATURES)
    assert bias.shape == (OUT_FEATURES,)

    tile_n = _choose_tile(n)
    n_pad = _round_up(n, tile_n)
    x_p = x if n_pad == n else jnp.pad(x, ((0, n_pad - n), (0, 0)))

    out_p = pl.pallas_call(
        _linear_kernel,
        out_shape=jax.ShapeDtypeStruct((n_pad, OUT_FEATURES), x.dtype),
        grid_spec=pltpu.PrefetchScalarGridSpec(
            num_scalar_prefetch=0,
            grid=(n_pad // tile_n,),
            in_specs=[
                pl.BlockSpec(memory_space=pltpu.MemorySpace.SMEM),      # weight (2,2)
                pl.BlockSpec(memory_space=pltpu.MemorySpace.SMEM),      # bias (2,)
                pl.BlockSpec((tile_n, IN_FEATURES), lambda i: (i, 0)),  # x rows
            ],
            out_specs=pl.BlockSpec((tile_n, OUT_FEATURES), lambda i: (i, 0)),
        ),
        compiler_params=pltpu.CompilerParams(
            dimension_semantics=("parallel",),   # batch axis shards across v7x's 2 TCs
        ),
    )(weight, bias, x_p)

    return out_p if n_pad == n else out_p[:n]


def linear_block(x, weight, bias, *, verbose=True):
    """Mirrors LinearBlock.forward: y = linear(x); print; return linear(x)."""
    y = linear_block_forward(x, weight, bias)
    if verbose:
        # Host-side print kept for module-semantics parity; disable when benchmarking.
        print(f"{x} -> {y}, delta: {y - x}")
    return y  # the same layer applied to the same input yields the same value


if __name__ == "__main__":
    key = jax.random.PRNGKey(0)
    kx, kw, kb, kx2 = jax.random.split(key, 4)

    # Deterministic parameter init (shapes per nn.Linear(2, 2)).
    bound = 1.0 / (IN_FEATURES ** 0.5)
    weight = jax.random.uniform(
        kw, (OUT_FEATURES, IN_FEATURES), jnp.float32, -bound, bound
    )
    bias = jax.random.uniform(kb, (OUT_FEATURES,), jnp.float32, -bound, bound)

    # Small input consistent with Linear(2, 2): batch of 8 rows, 2 features.
    x = jax.random.normal(kx, (8, IN_FEATURES), jnp.float32)
    out = jax.block_until_ready(linear_block(x, weight, bias))
    ref = x @ weight.T + bias
    assert jnp.allclose(out, ref, atol=1e-5, rtol=1e-5), "mismatch vs reference (n=8)"

    # Larger, non-multiple-of-tile batch exercises the multi-block / padded path.
    x2 = jax.random.normal(kx2, (2050, IN_FEATURES), jnp.float32)
    out2 = jax.block_until_ready(linear_block(x2, weight, bias, verbose=False))
    ref2 = x2 @ weight.T + bias
    assert jnp.allclose(out2, ref2, atol=1e-5, rtol=1e-5), "mismatch vs reference (n=2050)"

    print("KERNEL_OK")
</pallas_src>

<mosaic_0001>
module attributes {stable_mosaic.version = 11 : i64} {
  func.func @_linear_kernel(%arg0: i32, %arg1: memref<2x2xf32, #tpu.memory_space<smem>>, %arg2: memref<2xf32, #tpu.memory_space<smem>>, %arg3: memref<8x2xf32, #tpu.memory_space<vmem>>, %arg4: memref<8x2xf32, #tpu.memory_space<vmem>>) attributes {dimension_semantics = [#tpu.dimension_semantics<parallel>], iteration_bounds = array<i64: 1>, scalar_prefetch = 0 : i64, scratch_operands = 0 : i64, tpu.core_type = #tpu.core_type<tc>, window_params = [{transform_indices = @transform_0, window_bounds = array<i64: 2, 2>}, {transform_indices = @transform_1, window_bounds = array<i64: 2>}, {transform_indices = @transform_2, window_bounds = array<i64: 8, 2>}, {transform_indices = @transform_3, window_bounds = array<i64: 8, 2>}]} {
    %c0 = arith.constant 0 : index
    %c0_0 = arith.constant 0 : index
    %0 = vector.load %arg3[%c0, %c0_0] : memref<8x2xf32, #tpu.memory_space<vmem>>, vector<8x2xf32>
    %1 = vector.extract_strided_slice %0 {offsets = [0, 0], sizes = [8, 1], strides = [1, 1]} : vector<8x2xf32> to vector<8x1xf32>
    %2 = vector.extract_strided_slice %0 {offsets = [0, 1], sizes = [8, 1], strides = [1, 1]} : vector<8x2xf32> to vector<8x1xf32>
    %3 = tpu.iota {dimensions = array<i32: 1>} : vector<8x2xi32>
    %c0_i32 = arith.constant 0 : i32
    %4 = vector.broadcast %c0_i32 : i32 to vector<8x2xi32>
    %5 = arith.cmpi eq, %3, %4 : vector<8x2xi32>
    %c0_1 = arith.constant 0 : index
    %c0_2 = arith.constant 0 : index
    %6 = memref.load %arg1[%c0_1, %c0_2] : memref<2x2xf32, #tpu.memory_space<smem>>
    %c1 = arith.constant 1 : index
    %c0_3 = arith.constant 0 : index
    %7 = memref.load %arg1[%c1, %c0_3] : memref<2x2xf32, #tpu.memory_space<smem>>
    %8 = vector.broadcast %6 : f32 to vector<8x2xf32>
    %9 = vector.broadcast %7 : f32 to vector<8x2xf32>
    %10 = arith.select %5, %8, %9 : vector<8x2xi1>, vector<8x2xf32>
    %c0_i32_4 = arith.constant 0 : i32
    %11 = vector.broadcast %c0_i32_4 : i32 to vector<8x2xi32>
    %12 = arith.cmpi eq, %3, %11 : vector<8x2xi32>
    %c0_5 = arith.constant 0 : index
    %c1_6 = arith.constant 1 : index
    %13 = memref.load %arg1[%c0_5, %c1_6] : memref<2x2xf32, #tpu.memory_space<smem>>
    %c1_7 = arith.constant 1 : index
    %c1_8 = arith.constant 1 : index
    %14 = memref.load %arg1[%c1_7, %c1_8] : memref<2x2xf32, #tpu.memory_space<smem>>
    %15 = vector.broadcast %13 : f32 to vector<8x2xf32>
    %16 = vector.broadcast %14 : f32 to vector<8x2xf32>
    %17 = arith.select %12, %15, %16 : vector<8x2xi1>, vector<8x2xf32>
    %c0_i32_9 = arith.constant 0 : i32
    %18 = vector.broadcast %c0_i32_9 : i32 to vector<8x2xi32>
    %19 = arith.cmpi eq, %3, %18 : vector<8x2xi32>
    %c0_10 = arith.constant 0 : index
    %20 = memref.load %arg2[%c0_10] : memref<2xf32, #tpu.memory_space<smem>>
    %c1_11 = arith.constant 1 : index
    %21 = memref.load %arg2[%c1_11] : memref<2xf32, #tpu.memory_space<smem>>
    %22 = vector.broadcast %20 : f32 to vector<8x2xf32>
    %23 = vector.broadcast %21 : f32 to vector<8x2xf32>
    %24 = arith.select %19, %22, %23 : vector<8x2xi1>, vector<8x2xf32>
    %25 = vector.broadcast %1 : vector<8x1xf32> to vector<8x2xf32>
    %26 = arith.mulf %25, %10 : vector<8x2xf32>
    %27 = vector.broadcast %2 : vector<8x1xf32> to vector<8x2xf32>
    %28 = arith.mulf %27, %17 : vector<8x2xf32>
    %29 = arith.addf %26, %28 : vector<8x2xf32>
    %30 = arith.addf %29, %24 : vector<8x2xf32>
    %c0_12 = arith.constant 0 : index
    %c0_13 = arith.constant 0 : index
    %31 = vector.load %arg4[%c0_12, %c0_13] : memref<8x2xf32, #tpu.memory_space<vmem>>, vector<8x2xf32>
    tpu.vector_store %arg4[%c0_12, %c0_13], %30 {strides = array<i32>} : memref<8x2xf32, #tpu.memory_space<vmem>>, vector<8x2xf32>,
    return
  }
  func.func @transform_0(%arg0: i32) -> (i32, i32) {
    %c0_i32 = arith.constant 0 : i32
    %c0_i32_0 = arith.constant 0 : i32
    %c0_i32_1 = arith.constant 0 : i32
    return %c0_i32, %c0_i32_0 : i32, i32
  }
  func.func @transform_1(%arg0: i32) -> i32 {
    %c0_i32 = arith.constant 0 : i32
    %c0_i32_0 = arith.constant 0 : i32
    return %c0_i32 : i32
  }
  func.func @transform_2(%arg0: i32) -> (i32, i32) {
    %c0_i32 = arith.constant 0 : i32
    %c0_i32_0 = arith.constant 0 : i32
    return %arg0, %c0_i32 : i32, i32
  }
  func.func @transform_3(%arg0: i32) -> (i32, i32) {
    %c0_i32 = arith.constant 0 : i32
    %c0_i32_0 = arith.constant 0 : i32
    return %arg0, %c0_i32 : i32, i32
  }
}

</mosaic_0001>

<llo_original>
// kernel: linear_block_forward.1
$region0: #{linear_block_forward.1}
  #allocation0 [shape = 'u32[]', space=smem, size = 0x4, offset = 0x4, fixed_abs, tag = 'smem constant byte address 0x4 - core index']
  #allocation1 [shape = 'u32[144,128]{1,0:T(1,128)}', space=vmem, size = 0x12000, scoped, tag = 'internal scratch']
  %s0 = inlined_call_operand.vmem [shape: f32[2,2], index: 0, kind: input, shape index: {}]
  %s1 = inlined_call_operand.vmem [shape: f32[2], index: 1, kind: input, shape index: {}]
  %s2 = inlined_call_operand.vmem [shape: f32[8,2], index: 2, kind: input, shape index: {}]
  %s3 = inlined_call_operand.vmem [shape: f32[8,2], index: 3, kind: output, shape index: {}]
  %s4 = sld [smem:[#allocation0]]
  $region30: #{linear_block_forward.1} parent=0
    _
  %s6 = ssub.s32 1, %s4
  %s7 = scalar_select 0, %s6, %s4
  $region1: #{linear_block_forward.1} parent=0
    #allocation2 [shape = 'u8[1024]{0}', space=smem, size = 0x400, scoped, tag = 'input window, operand 0, single buffered']
    #allocation3 [shape = 's32[1]{0}', space=sflag, size = 0x4, scoped, tag = 'scoped memory for linear_block_forward.1']
    #allocation4 [shape = 'u8[512]{0}', space=smem, size = 0x200, scoped, tag = 'input window, operand 1, single buffered']
    #allocation5 [shape = 's32[1]{0}', space=sflag, size = 0x4, scoped, tag = 'scoped memory for linear_block_forward.1']
    %8 = vsyncpa [#allocation3], 0
    %9 = vsyncpa [#allocation5], 0
    // Predicated region
    $region2: #{linear_block_forward.1} parent=1 // pred_check
      _
    $region3: #{linear_block_forward.1} parent=1 // pred_check_branch
      %11 = sbr.rel (0) target = $region5
    $region4: #{linear_block_forward.1} parent=1 // pred_region
      %s13 = ssub.s32 32, 32
      %14 = vsyncadd [#allocation3], %s13
      %s16 = sshll.u32 %s0, 4
      %s17 = int_to_ptr.vmem [resolvable:$true] %s16
      %19 = dma.vmem_to_smem %s17, 32, [#allocation2], [#allocation3]
    $region5: #{linear_block_forward.1} parent=1 // pred_fallthru
      _
    // Predicated region
    $region6: #{linear_block_forward.1} parent=1 // pred_check
      _
    $region7: #{linear_block_forward.1} parent=1 // pred_check_branch
      %21 = sbr.rel (0) target = $region9
    $region8: #{linear_block_forward.1} parent=1 // pred_region
      %s23 = ssub.s32 16, 16
      %24 = vsyncadd [#allocation5], %s23
      %s26 = sshll.u32 %s1, 4
      %s27 = int_to_ptr.vmem [resolvable:$true] %s26
      %29 = dma.vmem_to_smem %s27, 16, [#allocation4], [#allocation5]
    $region9: #{linear_block_forward.1} parent=1 // pred_fallthru
      _
    // Predicated region
    $region10: #{linear_block_forward.1} parent=1 // pred_check
      _
    $region11: #{linear_block_forward.1} parent=1 // pred_check_branch
      %31 = sbr.rel (0) target = $region13
    $region12: #{linear_block_forward.1} parent=1 // pred_region
      _
    $region13: #{linear_block_forward.1} parent=1 // pred_fallthru
      _
    // Predicated region
    $region14: #{linear_block_forward.1} parent=1 // pred_check
      _
    $region15: #{linear_block_forward.1} parent=1 // pred_check_branch
      %33 = sbr.rel (0) target = $region17
    $region16: #{linear_block_forward.1} parent=1 // pred_region
      %34 = dma.done [#allocation3], 32
    $region17: #{linear_block_forward.1} parent=1 // pred_fallthru
      _
    // Predicated region
    $region18: #{linear_block_forward.1} parent=1 // pred_check
      _
    $region19: #{linear_block_forward.1} parent=1 // pred_check_branch
      %36 = sbr.rel (0) target = $region21
    $region20: #{linear_block_forward.1} parent=1 // pred_region
      %37 = dma.done [#allocation5], 16
    $region21: #{linear_block_forward.1} parent=1 // pred_fallthru
      _
    %38 = sfence
    %v39 = vld [vmem:[%s2] sm:$0xff]
    %v40 = vlaneseq
    %v41 = vand.u32 %v40, 127
    %vm42 = vcmp.eq.s32.totalorder %v41, 0
    %s43 = sld [smem:[#allocation2]]
    %s44 = sld [smem:[#allocation2 + $0x80]]
    %v45 = vstv %s43
    %v46 = vstv %s44
    %v47 = vsel %vm42, %v45, %v46
    %s48 = sld [smem:[#allocation2 + $0x1]]
    %s49 = sld [smem:[#allocation2 + $0x81]]
    %v50 = vstv %s48
    %v51 = vstv %s49
    %v52 = vsel %vm42, %v50, %v51
    %s53 = sld [smem:[#allocation4]]
    %s54 = sld [smem:[#allocation4 + $0x1]]
    %v55 = vstv %s53
    %v56 = vstv %s54
    %v57 = vsel %vm42, %v55, %v56
    %59 = vset.pattern.permute.xlu0 0
    %60 = vperm.xlu0 %59, %v39
    %v61 = vpop.permute.xlu0 %60
    %v63 = vmul.f32 %v61, %v47
    %64 = vset.pattern.permute.xlu0 1
    %65 = vperm.xlu0 %64, %v39
    %v66 = vpop.permute.xlu0 %65
    %v68 = vmul.f32 %v66, %v52
    %v69 = vadd.f32 %v63, %v68
    %v70 = vadd.f32 %v69, %v57
    %vm71 = vcmask 15360
    %72 = vst.msk [vmem:[%s3] sm:$0xff] %vm71, %v70
    // Predicated region
    $region22: #{linear_block_forward.1} parent=1 // pred_check
      _
    $region23: #{linear_block_forward.1} parent=1 // pred_check_branch
      %74 = sbr.rel (0) target = $region25
    $region24: #{linear_block_forward.1} parent=1 // pred_region
      _
    $region25: #{linear_block_forward.1} parent=1 // pred_fallthru
      _
    // Predicated region
    $region26: #{linear_block_forward.1} parent=1 // pred_check
      _
    $region27: #{linear_block_forward.1} parent=1 // pred_check_branch
      %76 = sbr.rel (0) target = $region29
    $region28: #{linear_block_forward.1} parent=1 // pred_region
      _
    $region29: #{linear_block_forward.1} parent=1 // pred_fallthru
      _
    %77 = vsyncpa [#allocation3], 1
    %78 = vsyncpa [#allocation5], 1

</llo_original>
